<compile_context>
chip_gen: v7x
topology: tpu7x:2x2x1
jax: 0.10.0
libtpu: 0.0.40
codegen_flags: <defaults>
</compile_context>

<pallas_src>
import jax
import jax.numpy as jnp
from jax.experimental import pallas as pl
from jax.experimental.pallas import tpu as pltpu

_LANES = 128           # TPU vreg lane width; keep the last dim lane-dense.
_MAX_BLOCK_ROWS = 512  # (512, 128) f32 tile = 256 KiB per buffer; ~85% of HBM roofline.


def _touch_kernel(pred_ref, true_ref, pred_out_ref, true_out_ref):
    # Pure identity pass-through in VMEM (the reference forward computes nothing).
    pred_out_ref[...] = pred_ref[...]
    true_out_ref[...] = true_ref[...]


def _to_lane_dense(x):
    """Flatten x to a lane-dense (rows, 128) slab, zero-padding the tail.

    Returns (slab, block_rows) where block_rows evenly divides slab rows and
    either equals the full row extent (small inputs) or is a multiple of 8.
    """
    n = x.size
    rows = pl.cdiv(n, _LANES)
    if rows > _MAX_BLOCK_ROWS:
        block_rows = _MAX_BLOCK_ROWS
        rows = pl.cdiv(rows, block_rows) * block_rows  # pad rows to a block multiple
    else:
        block_rows = rows  # single full-extent block; (8,128) rule satisfied by equality
    padded = rows * _LANES
    flat = x.reshape(-1)
    if padded != n:
        flat = jnp.pad(flat, (0, padded - n))
    return flat.reshape(rows, _LANES), block_rows


def abstract_metrics_touch(pred: jax.Array, true_data: jax.Array):
    """Debug-only Pallas pass-through of (pred, true_data).

    Not called on the training hot path (reference forward is a no-op); kept
    to exercise / validate the TPU Pallas pipeline.
    """
    assert pred.shape == true_data.shape, "pred / true_data must share a shape"

    pred_slab, block_rows = _to_lane_dense(pred)
    true_slab, _ = _to_lane_dense(true_data)
    rows = pred_slab.shape[0]
    grid = (rows // block_rows,)

    spec = pl.BlockSpec((block_rows, _LANES), lambda i: (i, 0))
    total_bytes = (
        pred_slab.size * pred_slab.dtype.itemsize
        + true_slab.size * true_slab.dtype.itemsize
    )

    pred_out, true_out = pl.pallas_call(
        _touch_kernel,
        grid=grid,
        in_specs=[spec, spec],
        out_specs=[spec, spec],
        out_shape=[
            jax.ShapeDtypeStruct(pred_slab.shape, pred_slab.dtype),
            jax.ShapeDtypeStruct(true_slab.shape, true_slab.dtype),
        ],
        # Identity copy: alias outputs onto the (intermediate) inputs so no
        # fresh HBM output buffers are materialized.
        input_output_aliases={0: 0, 1: 1},
        compiler_params=pltpu.CompilerParams(
            # v7x: split tiles across the 2 TensorCores; no-op on v5e/v6e.
            dimension_semantics=("parallel",),
        ),
        cost_estimate=pl.CostEstimate(
            flops=0, transcendentals=0, bytes_accessed=2 * total_bytes
        ),
    )(pred_slab, true_slab)

    # Undo the lane-dense packing.
    pred_out = pred_out.reshape(-1)[: pred.size].reshape(pred.shape)
    true_out = true_out.reshape(-1)[: true_data.size].reshape(true_data.shape)
    return pred_out, true_out


class TrainAbstractMetricsDiscrete:
    """JAX/Pallas port of the abstract (no-op) training metrics module."""

    def __init__(self, debug_touch: bool = False):
        # Reference __init__ creates no parameters / buffers.
        self.debug_touch = debug_touch

    def forward(self, pred, true_data, log: bool):
        # Reference forward is `pass` -> None.  Per the perf review, the hot
        # path does NOT launch any Pallas kernel (it would be pure HBM traffic
        # for zero useful work).  The touch kernel is only run when explicitly
        # requested for plumbing/debug validation.
        # TODO(synk): reference forward body is empty; no metric math exists to port.
        if self.debug_touch:
            jax.block_until_ready(abstract_metrics_touch(pred, true_data))
        return None

    def __call__(self, pred, true_data, log: bool):
        return self.forward(pred, true_data, log)

    def reset(self):
        # Reference reset is a no-op.
        pass

    def log_epoch_metrics(self):
        return (0, 0)


if __name__ == "__main__":
    key = jax.random.PRNGKey(0)
    k_pred, k_true, k_big = jax.random.split(key, 3)

    # Small discrete-metrics-style shapes: [batch, nodes, classes].
    B, N, C = 2, 8, 32
    pred = jax.random.normal(k_pred, (B, N, C), dtype=jnp.float32)
    true_data = jax.nn.one_hot(
        jax.random.randint(k_true, (B, N), 0, C), C, dtype=jnp.float32
    )

    # Run the (debug) Pallas kernel directly and block on its outputs.
    pred_out, true_out = abstract_metrics_touch(pred, true_data)
    jax.block_until_ready(pred_out)
    jax.block_until_ready(true_out)
    assert pred_out.shape == pred.shape and true_out.shape == true_data.shape
    assert bool(jnp.all(pred_out == pred)) and bool(jnp.all(true_out == true_data))

    # A second, slightly larger case that exercises the tiled/padded grid path
    # (640 raw rows -> padded to 1024 rows, grid of 2 blocks).
    big = jax.random.normal(k_big, (4, 128, 160), dtype=jnp.float32)
    big_a, big_b = abstract_metrics_touch(big, big)
    jax.block_until_ready(big_a)
    assert bool(jnp.all(big_a == big)) and bool(jnp.all(big_b == big))

    # Exercise the module API with reference semantics (no kernel on hot path).
    metrics = TrainAbstractMetricsDiscrete()
    result = metrics(pred, true_data, log=True)
    assert result is None            # forward returns None (body is `pass`)
    metrics.reset()                  # no-op
    assert metrics.log_epoch_metrics() == (0, 0)

    # Debug-touch mode still returns None but routes tensors through the kernel.
    metrics_dbg = TrainAbstractMetricsDiscrete(debug_touch=True)
    assert metrics_dbg(pred, true_data, log=False) is None

    print("KERNEL_OK")
</pallas_src>

<mosaic_0001>
module attributes {stable_mosaic.version = 11 : i64} {
  func.func @_touch_kernel(%arg0: i32, %arg1: memref<4x128xf32, #tpu.memory_space<vmem>>, %arg2: memref<4x128xf32, #tpu.memory_space<vmem>>, %arg3: memref<4x128xf32, #tpu.memory_space<vmem>>, %arg4: memref<4x128xf32, #tpu.memory_space<vmem>>) attributes {dimension_semantics = [#tpu.dimension_semantics<parallel>], iteration_bounds = array<i64: 1>, scalar_prefetch = 0 : i64, scratch_operands = 0 : i64, tpu.core_type = #tpu.core_type<tc>, window_params = [{transform_indices = @transform_0, window_bounds = array<i64: 4, 128>}, {transform_indices = @transform_1, window_bounds = array<i64: 4, 128>}, {transform_indices = @transform_2, window_bounds = array<i64: 4, 128>}, {transform_indices = @transform_3, window_bounds = array<i64: 4, 128>}]} {
    %c0 = arith.constant 0 : index
    %c0_0 = arith.constant 0 : index
    %0 = vector.load %arg1[%c0, %c0_0] : memref<4x128xf32, #tpu.memory_space<vmem>>, vector<4x128xf32>
    %c0_1 = arith.constant 0 : index
    %c0_2 = arith.constant 0 : index
    %1 = vector.load %arg3[%c0_1, %c0_2] : memref<4x128xf32, #tpu.memory_space<vmem>>, vector<4x128xf32>
    tpu.vector_store %arg3[%c0_1, %c0_2], %0 {strides = array<i32>} : memref<4x128xf32, #tpu.memory_space<vmem>>, vector<4x128xf32>,
    %c0_3 = arith.constant 0 : index
    %c0_4 = arith.constant 0 : index
    %2 = vector.load %arg2[%c0_3, %c0_4] : memref<4x128xf32, #tpu.memory_space<vmem>>, vector<4x128xf32>
    %c0_5 = arith.constant 0 : index
    %c0_6 = arith.constant 0 : index
    %3 = vector.load %arg4[%c0_5, %c0_6] : memref<4x128xf32, #tpu.memory_space<vmem>>, vector<4x128xf32>
    tpu.vector_store %arg4[%c0_5, %c0_6], %2 {strides = array<i32>} : memref<4x128xf32, #tpu.memory_space<vmem>>, vector<4x128xf32>,
    return
  }
  func.func @transform_0(%arg0: i32) -> (i32, i32) {
    %c0_i32 = arith.constant 0 : i32
    %c0_i32_0 = arith.constant 0 : i32
    return %arg0, %c0_i32 : i32, i32
  }
  func.func @transform_1(%arg0: i32) -> (i32, i32) {
    %c0_i32 = arith.constant 0 : i32
    %c0_i32_0 = arith.constant 0 : i32
    return %arg0, %c0_i32 : i32, i32
  }
  func.func @transform_2(%arg0: i32) -> (i32, i32) {
    %c0_i32 = arith.constant 0 : i32
    %c0_i32_0 = arith.constant 0 : i32
    return %arg0, %c0_i32 : i32, i32
  }
  func.func @transform_3(%arg0: i32) -> (i32, i32) {
    %c0_i32 = arith.constant 0 : i32
    %c0_i32_0 = arith.constant 0 : i32
    return %arg0, %c0_i32 : i32, i32
  }
}

</mosaic_0001>

<llo_original>
// kernel: tpu_custom_call.1
$region0: #{tpu_custom_call.1}
  #allocation0 [shape = 'u32[]', space=smem, size = 0x4, offset = 0x4, fixed_abs, tag = 'smem constant byte address 0x4 - core index']
  #allocation1 [shape = 'u32[144,128]{1,0:T(1,128)}', space=vmem, size = 0x12000, scoped, tag = 'internal scratch']
  %s0 = inlined_call_operand.hbm [shape: f32[4,128], index: 0, kind: input, shape index: {}, may-alias: {0,2}]
  %s1 = inlined_call_operand.hbm [shape: f32[4,128], index: 1, kind: input, shape index: {}, may-alias: {1,3}]
  %s2 = inlined_call_operand.hbm [shape: f32[4,128], index: 2, kind: output, shape index: {0}, may-alias: {0,2}]
  %s3 = inlined_call_operand.hbm [shape: f32[4,128], index: 3, kind: output, shape index: {1}, may-alias: {1,3}]
  %4 = xla_tuple %s2, %s3
  %s5 = sld [smem:[#allocation0]]
  $region34: #{tpu_custom_call.1} parent=0
    _
  %s7 = ssub.s32 1, %s5
  %s8 = scalar_select 0, %s7, %s5
  $region1: #{tpu_custom_call.1} parent=0
    #allocation2 [shape = 'u8[2048]{0}', space=vmem, size = 0x800, scoped, tag = 'input window, operand 0, single buffered']
    #allocation3 [shape = 's32[1]{0}', space=sflag, size = 0x4, scoped, tag = 'scoped memory for tpu_custom_call.1']
    #allocation4 [shape = 's32[1]{0}', space=sflag, size = 0x4, scoped, tag = 'scoped memory for tpu_custom_call.1']
    #allocation5 [shape = 'u8[2048]{0}', space=vmem, size = 0x800, scoped, tag = 'input window, operand 1, single buffered']
    #allocation6 [shape = 's32[1]{0}', space=sflag, size = 0x4, scoped, tag = 'scoped memory for tpu_custom_call.1']
    #allocation7 [shape = 'u8[2048]{0}', space=vmem, size = 0x800, scoped, tag = 'output window, operand 0, single buffered']
    #allocation8 [shape = 'u8[2048]{0}', space=vmem, size = 0x800, scoped, tag = 'output window, operand 1, single buffered']
    #allocation9 [shape = 's32[1]{0}', space=sflag, size = 0x4, scoped, tag = 'scoped memory for tpu_custom_call.1']
    %9 = vsyncpa [#allocation3], 0
    %10 = vsyncpa [#allocation6], 0
    %11 = vsyncpa [#allocation4], 0
    %12 = vsyncpa [#allocation9], 0
    // Predicated region
    $region2: #{tpu_custom_call.1} parent=1 // pred_check
      _
    $region3: #{tpu_custom_call.1} parent=1 // pred_check_branch
      %14 = sbr.rel (0) target = $region5
    $region4: #{tpu_custom_call.1} parent=1 // pred_region
      %s16 = ssub.s32 64, 64
      %17 = vsyncadd [#allocation3], %s16
      %s19 = sshll.u32 [#allocation2], 4
      %s20 = int_to_ptr.vmem [resolvable:$true] %s19
      %22 = dma.hbm_to_vmem [thread:$0]  %s0, 64, %s20, [#allocation3]
    $region5: #{tpu_custom_call.1} parent=1 // pred_fallthru
      _
    // Predicated region
    $region6: #{tpu_custom_call.1} parent=1 // pred_check
      _
    $region7: #{tpu_custom_call.1} parent=1 // pred_check_branch
      %24 = sbr.rel (0) target = $region9
    $region8: #{tpu_custom_call.1} parent=1 // pred_region
      %s26 = ssub.s32 64, 64
      %27 = vsyncadd [#allocation6], %s26
      %s29 = sshll.u32 [#allocation5], 4
      %s30 = int_to_ptr.vmem [resolvable:$true] %s29
      %32 = dma.hbm_to_vmem [thread:$0]  %s1, 64, %s30, [#allocation6]
    $region9: #{tpu_custom_call.1} parent=1 // pred_fallthru
      _
    // Predicated region
    $region10: #{tpu_custom_call.1} parent=1 // pred_check
      _
    $region11: #{tpu_custom_call.1} parent=1 // pred_check_branch
      %34 = sbr.rel (0) target = $region13
    $region12: #{tpu_custom_call.1} parent=1 // pred_region
      %35 = dma.done [#allocation3], 64
    $region13: #{tpu_custom_call.1} parent=1 // pred_fallthru
      _
    // Predicated region
    $region14: #{tpu_custom_call.1} parent=1 // pred_check
      _
    $region15: #{tpu_custom_call.1} parent=1 // pred_check_branch
      %37 = sbr.rel (0) target = $region17
    $region16: #{tpu_custom_call.1} parent=1 // pred_region
      %38 = dma.done [#allocation6], 64
    $region17: #{tpu_custom_call.1} parent=1 // pred_fallthru
      _
    %v39 = vld [vmem:[#allocation2] sm:$0xf]
    %40 = vst [vmem:[#allocation7] sm:$0xf] %v39
    %v41 = vld [vmem:[#allocation5] sm:$0xf]
    %42 = vst [vmem:[#allocation8] sm:$0xf] %v41
    // Predicated region
    $region18: #{tpu_custom_call.1} parent=1 // pred_check
      _
    $region19: #{tpu_custom_call.1} parent=1 // pred_check_branch
      %44 = sbr.rel (0) target = $region21
    $region20: #{tpu_custom_call.1} parent=1 // pred_region
      %s46 = ssub.s32 64, 64
      %47 = vsyncadd [#allocation4], %s46
      %s49 = sshll.u32 [#allocation7], 4
      %s50 = int_to_ptr.vmem [resolvable:$true] %s49
      %52 = dma.vmem_to_hbm [thread:$0]  %s50, 64, %s2, [#allocation4]
    $region21: #{tpu_custom_call.1} parent=1 // pred_fallthru
      _
    // Predicated region
    $region22: #{tpu_custom_call.1} parent=1 // pred_check
      _
    $region23: #{tpu_custom_call.1} parent=1 // pred_check_branch
      %54 = sbr.rel (0) target = $region25
    $region24: #{tpu_custom_call.1} parent=1 // pred_region
      %s56 = ssub.s32 64, 64
      %57 = vsyncadd [#allocation9], %s56
      %s59 = sshll.u32 [#allocation8], 4
      %s60 = int_to_ptr.vmem [resolvable:$true] %s59
      %62 = dma.vmem_to_hbm [thread:$0]  %s60, 64, %s3, [#allocation9]
    $region25: #{tpu_custom_call.1} parent=1 // pred_fallthru
      _
    // Predicated region
    $region26: #{tpu_custom_call.1} parent=1 // pred_check
      _
    $region27: #{tpu_custom_call.1} parent=1 // pred_check_branch
      %64 = sbr.rel (0) target = $region29
    $region28: #{tpu_custom_call.1} parent=1 // pred_region
      %65 = dma.done [#allocation4], 64
    $region29: #{tpu_custom_call.1} parent=1 // pred_fallthru
      _
    // Predicated region
    $region30: #{tpu_custom_call.1} parent=1 // pred_check
      _
    $region31: #{tpu_custom_call.1} parent=1 // pred_check_branch
      %67 = sbr.rel (0) target = $region33
    $region32: #{tpu_custom_call.1} parent=1 // pred_region
      %68 = dma.done [#allocation9], 64
    $region33: #{tpu_custom_call.1} parent=1 // pred_fallthru
      _
    %69 = vsyncpa [#allocation3], 1
    %70 = vsyncpa [#allocation6], 1
    %71 = vsyncpa [#allocation4], 1
    %72 = vsyncpa [#allocation9], 1

</llo_original>
